<compile_context>
chip_gen: v5e
topology: v5e:2x2
jax: 0.10.0
libtpu: 0.0.40
codegen_flags: <defaults>
</compile_context>

<pallas_src>
import jax
import jax.numpy as jnp
from jax import lax
from jax.experimental import pallas as pl
from jax.experimental.pallas import tpu as pltpu


# ---------------------------------------------------------------------------
# Small problem: single-shot kernel, no grid, whole arrays as VMEM blocks.
# ---------------------------------------------------------------------------
def _linear_single_block_kernel(x_ref, w_ref, b_ref, o_ref):
    """out = x @ W^T + b, W in PyTorch (out, in) layout.

    The transpose is free: dot_general contracts axis 1 of x (in_features)
    with axis 1 of W (in_features) directly on the MXU.
    """
    acc = lax.dot_general(
        x_ref[...], w_ref[...],
        dimension_numbers=(((1,), (1,)), ((), ())),
        preferred_element_type=jnp.float32,
    )
    o_ref[...] = (acc + b_ref[...]).astype(o_ref.dtype)


def _linear_single_block(x, weight, bias2d):
    B = x.shape[0]
    out_features = weight.shape[0]
    vmem = pltpu.MemorySpace.VMEM
    return pl.pallas_call(
        _linear_single_block_kernel,
        out_shape=jax.ShapeDtypeStruct((B, out_features), x.dtype),
        in_specs=[
            pl.BlockSpec(memory_space=vmem),  # x       (B, in)
            pl.BlockSpec(memory_space=vmem),  # weight  (out, in) PyTorch layout
            pl.BlockSpec(memory_space=vmem),  # bias    (1, out)
        ],
        out_specs=pl.BlockSpec(memory_space=vmem),
    )(x, weight, bias2d)


# ---------------------------------------------------------------------------
# Large problem: tiled (M, N, K) grid with f32 accumulator (P1 + P3 pattern).
# Weight tile is (tn, tk) in PyTorch layout; contraction on axis 1 of both
# operands.  Bias is folded into the accumulator init at k == 0.
# ---------------------------------------------------------------------------
def _linear_tiled_kernel(x_ref, w_ref, b_ref, o_ref, acc_ref):
    k = pl.program_id(2)

    @pl.when(k == 0)
    def _():
        # Initialize accumulator with the (broadcast) bias: fuses bias add.
        acc_ref[...] = jnp.broadcast_to(
            b_ref[...].astype(jnp.float32), acc_ref.shape)

    acc_ref[...] += lax.dot_general(
        x_ref[...], w_ref[...],
        dimension_numbers=(((1,), (1,)), ((), ())),
        preferred_element_type=jnp.float32,
    )

    @pl.when(k == pl.num_programs(2) - 1)
    def _():
        o_ref[...] = acc_ref[...].astype(o_ref.dtype)


def _linear_tiled(x, weight, bias2d, *, tm=128, tn=128, tk=256):
    M, K = x.shape
    N = weight.shape[0]
    return pl.pallas_call(
        _linear_tiled_kernel,
        out_shape=jax.ShapeDtypeStruct((M, N), x.dtype),
        grid_spec=pltpu.PrefetchScalarGridSpec(
            num_scalar_prefetch=0,
            grid=(M // tm, N // tn, K // tk),
            in_specs=[
                pl.BlockSpec((tm, tk), lambda i, j, k: (i, k)),   # x tile
                pl.BlockSpec((tn, tk), lambda i, j, k: (j, k)),   # W tile (out, in)
                pl.BlockSpec((1, tn), lambda i, j, k: (0, j)),    # bias tile
            ],
            out_specs=pl.BlockSpec((tm, tn), lambda i, j, k: (i, j)),
            scratch_shapes=[pltpu.VMEM((tm, tn), jnp.float32)],
        ),
        compiler_params=pltpu.CompilerParams(
            dimension_semantics=("parallel", "parallel", "arbitrary"),
        ),
    )(x, weight, bias2d)


# ---------------------------------------------------------------------------
# Public wrapper: IntroModel.forward == nn.Linear(input_size, output_size)
# ---------------------------------------------------------------------------
def intro_model_forward(x, weight, bias, *, tm=128, tn=128, tk=256):
    """Pallas equivalent of IntroModel.forward (nn.Linear).

    x:      (B, in_features)            float32
    weight: (out_features, in_features) -- PyTorch convention, NOT transposed
    bias:   (out_features,)
    returns (B, out_features)
    """
    B, in_features = x.shape
    out_features = weight.shape[0]
    bias2d = bias.reshape(1, out_features)

    # Shrink the K tile if the problem is K-small but still aligned.
    tk_eff = min(tk, in_features) if in_features % min(tk, in_features) == 0 else tk

    use_tiled = (
        B % tm == 0 and out_features % tn == 0 and in_features % tk_eff == 0
        and B >= tm and out_features >= tn and in_features >= tk_eff
    )
    if use_tiled:
        return _linear_tiled(x, weight, bias2d, tm=tm, tn=tn, tk=tk_eff)
    # Small / unaligned shapes (e.g. out_features=16 < 128 lanes): the store is
    # masked and MXU utilization is tiny by construction; the single-block path
    # at least avoids all grid / double-buffer overhead.
    return _linear_single_block(x, weight, bias2d)


def init_linear_params(key, in_features, out_features):
    """Matches torch.nn.Linear default init: U(-1/sqrt(in), 1/sqrt(in))."""
    k_w, k_b = jax.random.split(key)
    bound = 1.0 / (in_features ** 0.5)
    weight = jax.random.uniform(
        k_w, (out_features, in_features), jnp.float32, -bound, bound)
    bias = jax.random.uniform(
        k_b, (out_features,), jnp.float32, -bound, bound)
    return weight, bias


if __name__ == "__main__":
    key = jax.random.PRNGKey(0)
    k_x, k_p, k_x2, k_p2 = jax.random.split(key, 4)

    # --- small shapes implied by the module (single-block path) -------------
    batch, input_size, output_size = 8, 32, 16
    x = jax.random.normal(k_x, (batch, input_size), jnp.float32)
    weight, bias = init_linear_params(k_p, input_size, output_size)

    out = jax.block_until_ready(intro_model_forward(x, weight, bias))
    ref = x @ weight.T + bias
    assert out.shape == (batch, output_size)
    assert jnp.allclose(out, ref, atol=1e-5, rtol=1e-5)

    # --- tile-aligned shapes exercise the tiled (M, N, K) path --------------
    B2, in2, out2 = 128, 256, 256
    x2 = jax.random.normal(k_x2, (B2, in2), jnp.float32)
    w2, b2 = init_linear_params(k_p2, in2, out2)

    out_t = jax.block_until_ready(intro_model_forward(x2, w2, b2))
    ref_t = x2 @ w2.T + b2
    assert out_t.shape == (B2, out2)
    assert jnp.allclose(out_t, ref_t, atol=1e-4, rtol=1e-4)

    print("KERNEL_OK")
</pallas_src>

<mosaic_0001>
module attributes {stable_mosaic.version = 11 : i64} {
  func.func @_linear_single_block_kernel(%arg0: memref<8x32xf32, #tpu.memory_space<vmem>>, %arg1: memref<16x32xf32, #tpu.memory_space<vmem>>, %arg2: memref<1x16xf32, #tpu.memory_space<vmem>>, %arg3: memref<8x16xf32, #tpu.memory_space<vmem>>) attributes {dimension_semantics = [], scalar_prefetch = 0 : i64, scratch_operands = 0 : i64, tpu.core_type = #tpu.core_type<tc>} {
    %c0 = arith.constant 0 : index
    %c0_0 = arith.constant 0 : index
    %0 = vector.load %arg0[%c0, %c0_0] : memref<8x32xf32, #tpu.memory_space<vmem>>, vector<8x32xf32>
    %c0_1 = arith.constant 0 : index
    %c0_2 = arith.constant 0 : index
    %1 = vector.load %arg1[%c0_1, %c0_2] : memref<16x32xf32, #tpu.memory_space<vmem>>, vector<16x32xf32>
    %cst = arith.constant dense<0.000000e+00> : vector<8x16xf32>
    %2 = tpu.matmul %0, %1, %cst {dimension_numbers = #tpu.dot_dimension_numbers<[1], [1], [0], [0], [0, 0, 1, 0], [], []>} : vector<8x32xf32>, vector<16x32xf32>, vector<8x16xf32> -> vector<8x16xf32>
    %c0_3 = arith.constant 0 : index
    %c0_4 = arith.constant 0 : index
    %3 = vector.load %arg2[%c0_3, %c0_4] : memref<1x16xf32, #tpu.memory_space<vmem>>, vector<1x16xf32>
    %4 = vector.broadcast %3 : vector<1x16xf32> to vector<8x16xf32>
    %5 = arith.addf %2, %4 : vector<8x16xf32>
    %c0_5 = arith.constant 0 : index
    %c0_6 = arith.constant 0 : index
    %6 = vector.load %arg3[%c0_5, %c0_6] : memref<8x16xf32, #tpu.memory_space<vmem>>, vector<8x16xf32>
    tpu.vector_store %arg3[%c0_5, %c0_6], %5 {strides = array<i32>} : memref<8x16xf32, #tpu.memory_space<vmem>>, vector<8x16xf32>,
    return
  }
}

</mosaic_0001>

<llo_original>
// kernel: tpu_custom_call.1
$region0: #{tpu_custom_call.1}
  #allocation0 [shape = 'u32[]', space=smem, size = 0x4, offset = 0x4, fixed_abs, tag = 'smem constant byte address 0x4 - core index']
  #allocation1 [shape = 'u32[72,128]{1,0:T(1,128)}', space=vmem, size = 0x9000, scoped, tag = 'internal scratch']
  %s0 = inlined_call_operand.hbm [shape: f32[8,32], index: 0, kind: input, shape index: {}]
  %s1 = inlined_call_operand.hbm [shape: f32[16,32], index: 1, kind: input, shape index: {}]
  %s2 = inlined_call_operand.vmem [shape: f32[1,16], index: 2, kind: input, shape index: {}]
  %s3 = inlined_call_operand.hbm [shape: f32[8,16], index: 3, kind: output, shape index: {}]
  %s4 = sld [smem:[#allocation0]]
  $region30: #{tpu_custom_call.1} parent=0
    _
  %s6 = ssub.s32 1, %s4
  %s7 = scalar_select 0, %s6, %s4
  $region1: #{tpu_custom_call.1} parent=0
    #allocation2 [shape = 'u8[4096]{0}', space=vmem, size = 0x1000, scoped, tag = 'input window, operand 0, single buffered']
    #allocation3 [shape = 's32[1]{0}', space=sflag, size = 0x4, scoped, tag = 'scoped memory for tpu_custom_call.1']
    #allocation4 [shape = 's32[1]{0}', space=sflag, size = 0x4, scoped, tag = 'scoped memory for tpu_custom_call.1']
    #allocation5 [shape = 'u8[8192]{0}', space=vmem, size = 0x2000, scoped, tag = 'input window, operand 1, single buffered']
    #allocation6 [shape = 's32[1]{0}', space=sflag, size = 0x4, scoped, tag = 'scoped memory for tpu_custom_call.1']
    #allocation7 [shape = 'u8[4096]{0}', space=vmem, size = 0x1000, scoped, tag = 'output window, operand 0, single buffered']
    %8 = vsyncpa [#allocation3], 0
    %9 = vsyncpa [#allocation6], 0
    %10 = vsyncpa [#allocation4], 0
    // Predicated region
    $region2: #{tpu_custom_call.1} parent=1 // pred_check
      _
    $region3: #{tpu_custom_call.1} parent=1 // pred_check_branch
      %12 = sbr.rel (0) target = $region5
    $region4: #{tpu_custom_call.1} parent=1 // pred_region
      %14 = vsyncadd [#allocation3], 0
      %s16 = sshll.u32 %s0, 4
      %s17 = int_to_ptr.hbm [resolvable:$true] %s16
      %s18 = sshll.u32 [#allocation2], 4
      %s19 = int_to_ptr.vmem [resolvable:$true] %s18
      %21 = dma.hbm_to_vmem [thread:$0]  %s17, 128, %s19, [#allocation3]
    $region5: #{tpu_custom_call.1} parent=1 // pred_fallthru
      _
    // Predicated region
    $region6: #{tpu_custom_call.1} parent=1 // pred_check
      _
    $region7: #{tpu_custom_call.1} parent=1 // pred_check_branch
      %23 = sbr.rel (0) target = $region9
    $region8: #{tpu_custom_call.1} parent=1 // pred_region
      %25 = vsyncadd [#allocation6], 0
      %s26 = sshll.u32 %s1, 4
      %s27 = int_to_ptr.hbm [resolvable:$true] %s26
      %s28 = sshll.u32 [#allocation5], 4
      %s29 = int_to_ptr.vmem [resolvable:$true] %s28
      %34 = dma.hbm_to_vmem [thread:$0]  %s27, 256, %s29, [#allocation6], 128, 128, 8
    $region9: #{tpu_custom_call.1} parent=1 // pred_fallthru
      _
    // Predicated region
    $region10: #{tpu_custom_call.1} parent=1 // pred_check
      _
    $region11: #{tpu_custom_call.1} parent=1 // pred_check_branch
      %36 = sbr.rel (0) target = $region13
    $region12: #{tpu_custom_call.1} parent=1 // pred_region
      _
    $region13: #{tpu_custom_call.1} parent=1 // pred_fallthru
      _
    // Predicated region
    $region14: #{tpu_custom_call.1} parent=1 // pred_check
      _
    $region15: #{tpu_custom_call.1} parent=1 // pred_check_branch
      %38 = sbr.rel (0) target = $region17
    $region16: #{tpu_custom_call.1} parent=1 // pred_region
      %40 = dma.done [#allocation3], 128
    $region17: #{tpu_custom_call.1} parent=1 // pred_fallthru
      _
    // Predicated region
    $region18: #{tpu_custom_call.1} parent=1 // pred_check
      _
    $region19: #{tpu_custom_call.1} parent=1 // pred_check_branch
      %42 = sbr.rel (0) target = $region21
    $region20: #{tpu_custom_call.1} parent=1 // pred_region
      %44 = dma.done [#allocation6], 256
    $region21: #{tpu_custom_call.1} parent=1 // pred_fallthru
      _
    %v45 = vld [vmem:[#allocation2] sm:$0xff]
    %v46 = vld [vmem:[#allocation5] sm:$0xff]
    %v47 = vld [vmem:[#allocation5 + $0x8] sm:$0xff]
    %v48 = vld [vmem:[%s2] sm:$0x1]
    %v50 = vperm.slane %v48, 0
    %vm52 = vcmask 261120
    %v54 = vsel %vm52, %v45, 0
    %v57 = vsel %vm52, %v46, 0
    %v60 = vsel %vm52, %v47, 0
    %62 = vmatpush.xpose.msra.mxu0 0.0
    %63 = vmatpush.xpose.msra.mxu0 0.0
    %64 = vmatpush.xpose.msra.mxu0 0.0
    %65 = vmatpush.xpose.msra.mxu0 0.0
    %66 = vmatpush.xpose.msra.mxu0 0.0
    %67 = vmatpush.xpose.msra.mxu0 0.0
    %68 = vmatpush.xpose.msra.mxu0 0.0
    %69 = vmatpush.xpose.msra.mxu0 0.0
    %70 = vmatpush.xpose.msra.mxu0 0.0
    %71 = vmatpush.xpose.msra.mxu0 0.0
    %72 = vmatpush.xpose.msra.mxu0 0.0
    %73 = vmatpush.xpose.msra.mxu0 0.0
    %74 = vmatpush.xpose.msra.mxu0 0.0
    %75 = vmatpush.xpose.msra.mxu0 0.0
    %76 = vmatpush.xpose.msra.mxu0 %v60
    %77 = vmatpush.xpose.msra.mxu0 %v57
    %78 = vmatmul.f32.gmra.mxu0 %v54
    %v79 = vpop.f32.mrf.mxu0
    %v80 = vadd.f32 %v50, %v79
    %81 = vdwg.mxu0
    %vm82 = vcmask 130048
    %83 = vst.msk [vmem:[#allocation7] sm:$0xff] %vm82, %v80
    // Predicated region
    $region22: #{tpu_custom_call.1} parent=1 // pred_check
      _
    $region23: #{tpu_custom_call.1} parent=1 // pred_check_branch
      %85 = sbr.rel (0) target = $region25
    $region24: #{tpu_custom_call.1} parent=1 // pred_region
      %87 = vsyncadd [#allocation4], 0
      %s89 = sshll.u32 [#allocation7], 4
      %s90 = int_to_ptr.vmem [resolvable:$true] %s89
      %s91 = sshll.u32 %s3, 4
      %s92 = int_to_ptr.hbm [resolvable:$true] %s91
      %94 = dma.vmem_to_hbm [thread:$0]  %s90, 128, %s92, [#allocation4]
    $region25: #{tpu_custom_call.1} parent=1 // pred_fallthru
      _
    // Predicated region
    $region26: #{tpu_custom_call.1} parent=1 // pred_check
      _
    $region27: #{tpu_custom_call.1} parent=1 // pred_check_branch
      %96 = sbr.rel (0) target = $region29
    $region28: #{tpu_custom_call.1} parent=1 // pred_region
      %98 = dma.done [#allocation4], 128
    $region29: #{tpu_custom_call.1} parent=1 // pred_fallthru
      _
    %99 = vsyncpa [#allocation3], 1
    %100 = vsyncpa [#allocation6], 1
    %101 = vsyncpa [#allocation4], 1

</llo_original>
